<compile_context>
chip_gen: v7x
topology: tpu7x:2x2x1
jax: 0.10.0
libtpu: 0.0.40
codegen_flags: <defaults>
</compile_context>

<pallas_src>
import functools

import jax
import jax.numpy as jnp
from jax.experimental import pallas as pl
from jax.experimental.pallas import tpu as pltpu


def rnn_fused_kernel(x_ref, h0_ref, wih_ref, whh_ref, b_ref, bout_ref,
                     wout_hbm, out_ref, hT_ref, hall_ref, wout_vmem, wout_sem,
                     *, T, Bp):
    """Whole-sequence Elman RNN + output projection in one invocation.

    Refs:
      x_ref    : (T*Bp, Ip) bf16  time-major, batch- and feature-padded input
      h0_ref   : (Bp, H)    f32   initial hidden state (padded rows are zero)
      wih_ref  : (Ip, H)    bf16  W_ih^T (padded rows are zero)
      whh_ref  : (H, H)     bf16  W_hh^T
      b_ref    : (1, H)     f32   b_ih + b_hh
      bout_ref : (1, Op)    f32   b_out (padded lanes are zero)
      wout_hbm : (H, Op)    bf16  W_out^T, left in HBM (pl.ANY)
      out_ref  : (T*Bp, Op) f32   per-timestep outputs (lane-dense)
      hT_ref   : (Bp, H)    f32   final hidden state
      hall_ref : (T, Bp, H) f32   VMEM scratch holding every h_t
      wout_vmem: (H, Op)    bf16  VMEM landing buffer for W_out
      wout_sem : DMA semaphore
    """
    # 0) Start the W_out fetch now; it is only needed in the epilogue, so the
    #    DMA is hidden behind the serial recurrence.
    wout_cp = pltpu.make_async_copy(wout_hbm, wout_vmem, wout_sem)
    wout_cp.start()

    H = whh_ref.shape[-1]

    # 1) Batched bf16 input projection + bias (f32 accumulation) for all
    #    timesteps, off the serial path.
    xwb = (jnp.dot(x_ref[...], wih_ref[...],
                   preferred_element_type=jnp.float32)
           + b_ref[...]).reshape(T, Bp, H)                 # (T, Bp, H) f32

    whh = whh_ref[...]                                     # bf16, loaded once
    h = h0_ref[...]                                        # (Bp, H) f32

    # 2) Serial recurrence: one bf16 (Bp,H)x(H,H) MXU pass + f32 tanh per step,
    #    statically unrolled (T=8).  Leading-axis indexing -> pure vreg select;
    #    hall_ref[t] stores are whole (8,128) tiles.
    # TODO(synk): on v6e/v7x, stage W_hh in the MXU weight registers across all
    #   steps via pltpu.matmul_push_rhs/matmul_acc_lhs/matmul_pop if the bundle
    #   dump shows Mosaic re-pushing the loop-invariant RHS every iteration.
    # TODO(synk): on v7x, accumulate h@W_hh onto xwb[t] in the MRB instead of
    #   the separate VALU add.
    for t in range(T):
        pre = xwb[t] + jnp.dot(h.astype(jnp.bfloat16), whh,
                               preferred_element_type=jnp.float32)
        h = jnp.tanh(pre)                                  # f32
        hall_ref[t] = h

    hT_ref[...] = h                                        # written exactly once

    # 3) Batched output projection + bias for all timesteps.
    wout_cp.wait()
    hall_bf = hall_ref[...].astype(jnp.bfloat16).reshape(T * Bp, H)
    out_ref[...] = (jnp.dot(hall_bf, wout_vmem[...],
                            preferred_element_type=jnp.float32)
                    + bout_ref[...]).astype(out_ref.dtype)


def rnn_forward(x, h_state, params):
    """x: (B, T, I) f32, h_state: (1, B, H) f32 -> ((B, T, O), (1, B, H))."""
    B, T, I = x.shape
    H = params["w_hh"].shape[0]
    O = params["w_out"].shape[0]
    LANE, SUB = 128, 8
    Ip = ((I + LANE - 1) // LANE) * LANE                   # 68 -> 128
    Op = ((O + LANE - 1) // LANE) * LANE                   # 68 -> 128
    Bp = ((B + SUB - 1) // SUB) * SUB                      # 2  -> 8

    bf = jnp.bfloat16

    # Time-major, batch padded to one sublane tile, features padded to a lane.
    x_tm = jnp.transpose(x, (1, 0, 2))                                  # (T, B, I)
    x_pad = jnp.pad(x_tm, ((0, 0), (0, Bp - B), (0, Ip - I)))           # (T, Bp, Ip)
    x_pad = x_pad.reshape(T * Bp, Ip).astype(bf)                        # (T*Bp, Ip) bf16

    h0 = jnp.pad(h_state[0], ((0, Bp - B), (0, 0)))                     # (Bp, H) f32 (pad rows = 0)
    wih_pad = jnp.pad(params["w_ih"].T, ((0, Ip - I), (0, 0))).astype(bf)      # (Ip, H)
    whh_t = params["w_hh"].T.astype(bf)                                  # (H, H)
    b = (params["b_ih"] + params["b_hh"])[None, :]                       # (1, H) f32
    wout_pad = jnp.pad(params["w_out"].T, ((0, 0), (0, Op - O))).astype(bf)    # (H, Op)
    bout_pad = jnp.pad(params["b_out"], (0, Op - O))[None, :]            # (1, Op) f32

    vmem = pl.BlockSpec(memory_space=pltpu.MemorySpace.VMEM)
    hbm = pl.BlockSpec(memory_space=pl.ANY)

    out_flat, h_T = pl.pallas_call(
        functools.partial(rnn_fused_kernel, T=T, Bp=Bp),
        out_shape=(jax.ShapeDtypeStruct((T * Bp, Op), jnp.float32),
                   jax.ShapeDtypeStruct((Bp, H), jnp.float32)),
        in_specs=[vmem, vmem, vmem, vmem, vmem, vmem, hbm],
        out_specs=(vmem, vmem),
        scratch_shapes=[pltpu.VMEM((T, Bp, H), jnp.float32),
                        pltpu.VMEM((H, Op), bf),
                        pltpu.SemaphoreType.DMA(())],
    )(x_pad, h0, wih_pad, whh_t, b, bout_pad, wout_pad)

    outs = out_flat.reshape(T, Bp, Op)[:, :B, :O]          # drop batch/lane padding
    return jnp.transpose(outs, (1, 0, 2)), h_T[:B][None]


def rnn_reference_f32(x, h_state, params):
    """Pure-JAX f32 reference of the PyTorch forward."""
    wih, whh = params["w_ih"], params["w_hh"]
    b = params["b_ih"] + params["b_hh"]
    wout, bout = params["w_out"], params["b_out"]

    def step(h, x_t):
        h_new = jnp.tanh(x_t @ wih.T + h @ whh.T + b)
        return h_new, h_new @ wout.T + bout

    h_T, outs = jax.lax.scan(step, h_state[0], jnp.transpose(x, (1, 0, 2)))
    return jnp.transpose(outs, (1, 0, 2)), h_T[None]


def rnn_reference_bf16(x, h_state, params):
    """Pure-JAX reference emulating the kernel's bf16-operand / f32-accum math."""
    bf = jnp.bfloat16
    wih = params["w_ih"].T.astype(bf)
    whh = params["w_hh"].T.astype(bf)
    wout = params["w_out"].T.astype(bf)
    b = (params["b_ih"] + params["b_hh"])
    bout = params["b_out"]

    def step(h, x_t):
        pre = (jnp.dot(x_t.astype(bf), wih, preferred_element_type=jnp.float32)
               + jnp.dot(h.astype(bf), whh, preferred_element_type=jnp.float32)
               + b)
        h_new = jnp.tanh(pre)
        out = (jnp.dot(h_new.astype(bf), wout,
                       preferred_element_type=jnp.float32) + bout)
        return h_new, out

    h_T, outs = jax.lax.scan(step, h_state[0], jnp.transpose(x, (1, 0, 2)))
    return jnp.transpose(outs, (1, 0, 2)), h_T[None]


def init_params(key, input_size=68, hidden_size=256):
    """Deterministic init mirroring nn.RNN / nn.Linear default uniform init."""
    k = jax.random.split(key, 6)
    s = 1.0 / jnp.sqrt(hidden_size)
    return {
        "w_ih": jax.random.uniform(k[0], (hidden_size, input_size),
                                   jnp.float32, -s, s),
        "w_hh": jax.random.uniform(k[1], (hidden_size, hidden_size),
                                   jnp.float32, -s, s),
        "b_ih": jax.random.uniform(k[2], (hidden_size,), jnp.float32, -s, s),
        "b_hh": jax.random.uniform(k[3], (hidden_size,), jnp.float32, -s, s),
        "w_out": jax.random.uniform(k[4], (input_size, hidden_size),
                                    jnp.float32, -s, s),
        "b_out": jax.random.uniform(k[5], (input_size,), jnp.float32, -s, s),
    }


if __name__ == "__main__":
    B, T, I, H = 2, 8, 68, 256

    key = jax.random.PRNGKey(0)
    k_x, k_h, k_p = jax.random.split(key, 3)
    x = jax.random.normal(k_x, (B, T, I), jnp.float32)
    h_state = jax.random.normal(k_h, (1, B, H), jnp.float32)
    params = init_params(k_p, input_size=I, hidden_size=H)

    outs, h_out = jax.jit(rnn_forward)(x, h_state, params)
    jax.block_until_ready((outs, h_out))

    assert outs.shape == (B, T, I) and h_out.shape == (1, B, H)

    # Tight check vs a reference that uses the same bf16-weight quantization.
    outs_q, h_q = rnn_reference_bf16(x, h_state, params)
    assert jnp.allclose(outs, outs_q, atol=5e-3, rtol=5e-3)
    assert jnp.allclose(h_out, h_q, atol=5e-3, rtol=5e-3)

    # Loose sanity check vs the full-f32 PyTorch-semantics reference.
    outs_ref, h_ref = rnn_reference_f32(x, h_state, params)
    assert jnp.allclose(outs, outs_ref, atol=1e-1, rtol=1e-1)
    assert jnp.allclose(h_out, h_ref, atol=1e-1, rtol=1e-1)

    print("KERNEL_OK")
</pallas_src>

<mosaic_0001>
module attributes {stable_mosaic.version = 11 : i64} {
  func.func @rnn_fused_kernel(%arg0: memref<64x128xbf16, #tpu.memory_space<vmem>>, %arg1: memref<8x256xf32, #tpu.memory_space<vmem>>, %arg2: memref<128x256xbf16, #tpu.memory_space<vmem>>, %arg3: memref<256x256xbf16, #tpu.memory_space<vmem>>, %arg4: memref<1x256xf32, #tpu.memory_space<vmem>>, %arg5: memref<1x128xf32, #tpu.memory_space<vmem>>, %arg6: memref<256x128xbf16, #tpu.memory_space<any>>, %arg7: memref<64x128xf32, #tpu.memory_space<vmem>>, %arg8: memref<8x256xf32, #tpu.memory_space<vmem>>, %arg9: memref<8x8x256xf32, #tpu.memory_space<vmem>>, %arg10: memref<256x128xbf16, #tpu.memory_space<vmem>>, %arg11: memref<!tpu.dma_semaphore, #tpu.memory_space<semaphore_mem>>) attributes {dimension_semantics = [], scalar_prefetch = 0 : i64, scratch_operands = 3 : i64, tpu.core_type = #tpu.core_type<tc>} {
    tpu.enqueue_dma source(%arg6 : memref<256x128xbf16, #tpu.memory_space<any>>) target(%arg10 : memref<256x128xbf16, #tpu.memory_space<vmem>>) target_semaphore(%arg11 : memref<!tpu.dma_semaphore, #tpu.memory_space<semaphore_mem>>)
    %c0 = arith.constant 0 : index
    %c0_0 = arith.constant 0 : index
    %0 = vector.load %arg0[%c0, %c0_0] : memref<64x128xbf16, #tpu.memory_space<vmem>>, vector<64x128xbf16>
    %c0_1 = arith.constant 0 : index
    %c0_2 = arith.constant 0 : index
    %1 = vector.load %arg2[%c0_1, %c0_2] : memref<128x256xbf16, #tpu.memory_space<vmem>>, vector<128x256xbf16>
    %cst = arith.constant dense<0.000000e+00> : vector<64x256xf32>
    %2 = tpu.matmul %0, %1, %cst {dimension_numbers = #tpu.dot_dimension_numbers<[1], [0], [0], [1], [0, 0, 1, 1], [], []>} : vector<64x128xbf16>, vector<128x256xbf16>, vector<64x256xf32> -> vector<64x256xf32>
    %c0_3 = arith.constant 0 : index
    %c0_4 = arith.constant 0 : index
    %3 = vector.load %arg4[%c0_3, %c0_4] : memref<1x256xf32, #tpu.memory_space<vmem>>, vector<1x256xf32>
    %4 = vector.broadcast %3 : vector<1x256xf32> to vector<64x256xf32>
    %5 = arith.addf %2, %4 : vector<64x256xf32>
    %6 = vector.shape_cast %5 : vector<64x256xf32> to vector<8x8x256xf32>
    %c0_5 = arith.constant 0 : index
    %c0_6 = arith.constant 0 : index
    %7 = vector.load %arg3[%c0_5, %c0_6] : memref<256x256xbf16, #tpu.memory_space<vmem>>, vector<256x256xbf16>
    %c0_7 = arith.constant 0 : index
    %c0_8 = arith.constant 0 : index
    %8 = vector.load %arg1[%c0_7, %c0_8] : memref<8x256xf32, #tpu.memory_space<vmem>>, vector<8x256xf32>
    %9 = vector.extract_strided_slice %6 {offsets = [0, 0, 0], sizes = [1, 8, 256], strides = [1, 1, 1]} : vector<8x8x256xf32> to vector<1x8x256xf32>
    %10 = vector.shape_cast %9 : vector<1x8x256xf32> to vector<8x256xf32>
    %11 = arith.truncf %8 : vector<8x256xf32> to vector<8x256xbf16>
    %cst_9 = arith.constant dense<0.000000e+00> : vector<8x256xf32>
    %12 = tpu.matmul %11, %7, %cst_9 {dimension_numbers = #tpu.dot_dimension_numbers<[1], [0], [0], [1], [0, 0, 1, 1], [], []>} : vector<8x256xbf16>, vector<256x256xbf16>, vector<8x256xf32> -> vector<8x256xf32>
    %13 = arith.addf %10, %12 : vector<8x256xf32>
    %14 = math.tanh %13 : vector<8x256xf32>
    %c0_10 = arith.constant 0 : index
    %c0_11 = arith.constant 0 : index
    %c0_12 = arith.constant 0 : index
    %15 = vector.load %arg9[%c0_10, %c0_11, %c0_12] : memref<8x8x256xf32, #tpu.memory_space<vmem>>, vector<1x8x256xf32>
    %16 = vector.shape_cast %15 : vector<1x8x256xf32> to vector<8x256xf32>
    %17 = vector.shape_cast %14 : vector<8x256xf32> to vector<1x8x256xf32>
    tpu.vector_store %arg9[%c0_10, %c0_11, %c0_12], %17 {strides = array<i32>} : memref<8x8x256xf32, #tpu.memory_space<vmem>>, vector<1x8x256xf32>,
    %18 = vector.extract_strided_slice %6 {offsets = [1, 0, 0], sizes = [1, 8, 256], strides = [1, 1, 1]} : vector<8x8x256xf32> to vector<1x8x256xf32>
    %19 = vector.shape_cast %18 : vector<1x8x256xf32> to vector<8x256xf32>
    %20 = arith.truncf %14 : vector<8x256xf32> to vector<8x256xbf16>
    %cst_13 = arith.constant dense<0.000000e+00> : vector<8x256xf32>
    %21 = tpu.matmul %20, %7, %cst_13 {dimension_numbers = #tpu.dot_dimension_numbers<[1], [0], [0], [1], [0, 0, 1, 1], [], []>} : vector<8x256xbf16>, vector<256x256xbf16>, vector<8x256xf32> -> vector<8x256xf32>
    %22 = arith.addf %19, %21 : vector<8x256xf32>
    %23 = math.tanh %22 : vector<8x256xf32>
    %c1 = arith.constant 1 : index
    %c0_14 = arith.constant 0 : index
    %c0_15 = arith.constant 0 : index
    %24 = vector.load %arg9[%c1, %c0_14, %c0_15] : memref<8x8x256xf32, #tpu.memory_space<vmem>>, vector<1x8x256xf32>
    %25 = vector.shape_cast %24 : vector<1x8x256xf32> to vector<8x256xf32>
    %26 = vector.shape_cast %23 : vector<8x256xf32> to vector<1x8x256xf32>
    tpu.vector_store %arg9[%c1, %c0_14, %c0_15], %26 {strides = array<i32>} : memref<8x8x256xf32, #tpu.memory_space<vmem>>, vector<1x8x256xf32>,
    %27 = vector.extract_strided_slice %6 {offsets = [2, 0, 0], sizes = [1, 8, 256], strides = [1, 1, 1]} : vector<8x8x256xf32> to vector<1x8x256xf32>
    %28 = vector.shape_cast %27 : vector<1x8x256xf32> to vector<8x256xf32>
    %29 = arith.truncf %23 : vector<8x256xf32> to vector<8x256xbf16>
    %cst_16 = arith.constant dense<0.000000e+00> : vector<8x256xf32>
    %30 = tpu.matmul %29, %7, %cst_16 {dimension_numbers = #tpu.dot_dimension_numbers<[1], [0], [0], [1], [0, 0, 1, 1], [], []>} : vector<8x256xbf16>, vector<256x256xbf16>, vector<8x256xf32> -> vector<8x256xf32>
    %31 = arith.addf %28, %30 : vector<8x256xf32>
    %32 = math.tanh %31 : vector<8x256xf32>
    %c2 = arith.constant 2 : index
    %c0_17 = arith.constant 0 : index
    %c0_18 = arith.constant 0 : index
    %33 = vector.load %arg9[%c2, %c0_17, %c0_18] : memref<8x8x256xf32, #tpu.memory_space<vmem>>, vector<1x8x256xf32>
    %34 = vector.shape_cast %33 : vector<1x8x256xf32> to vector<8x256xf32>
    %35 = vector.shape_cast %32 : vector<8x256xf32> to vector<1x8x256xf32>
    tpu.vector_store %arg9[%c2, %c0_17, %c0_18], %35 {strides = array<i32>} : memref<8x8x256xf32, #tpu.memory_space<vmem>>, vector<1x8x256xf32>,
    %36 = vector.extract_strided_slice %6 {offsets = [3, 0, 0], sizes = [1, 8, 256], strides = [1, 1, 1]} : vector<8x8x256xf32> to vector<1x8x256xf32>
    %37 = vector.shape_cast %36 : vector<1x8x256xf32> to vector<8x256xf32>
    %38 = arith.truncf %32 : vector<8x256xf32> to vector<8x256xbf16>
    %cst_19 = arith.constant dense<0.000000e+00> : vector<8x256xf32>
    %39 = tpu.matmul %38, %7, %cst_19 {dimension_numbers = #tpu.dot_dimension_numbers<[1], [0], [0], [1], [0, 0, 1, 1], [], []>} : vector<8x256xbf16>, vector<256x256xbf16>, vector<8x256xf32> -> vector<8x256xf32>
    %40 = arith.addf %37, %39 : vector<8x256xf32>
    %41 = math.tanh %40 : vector<8x256xf32>
    %c3 = arith.constant 3 : index
    %c0_20 = arith.constant 0 : index
    %c0_21 = arith.constant 0 : index
    %42 = vector.load %arg9[%c3, %c0_20, %c0_21] : memref<8x8x256xf32, #tpu.memory_space<vmem>>, vector<1x8x256xf32>
    %43 = vector.shape_cast %42 : vector<1x8x256xf32> to vector<8x256xf32>
    %44 = vector.shape_cast %41 : vector<8x256xf32> to vector<1x8x256xf32>
    tpu.vector_store %arg9[%c3, %c0_20, %c0_21], %44 {strides = array<i32>} : memref<8x8x256xf32, #tpu.memory_space<vmem>>, vector<1x8x256xf32>,
    %45 = vector.extract_strided_slice %6 {offsets = [4, 0, 0], sizes = [1, 8, 256], strides = [1, 1, 1]} : vector<8x8x256xf32> to vector<1x8x256xf32>
    %46 = vector.shape_cast %45 : vector<1x8x256xf32> to vector<8x256xf32>
    %47 = arith.truncf %41 : vector<8x256xf32> to vector<8x256xbf16>
    %cst_22 = arith.constant dense<0.000000e+00> : vector<8x256xf32>
    %48 = tpu.matmul %47, %7, %cst_22 {dimension_numbers = #tpu.dot_dimension_numbers<[1], [0], [0], [1], [0, 0, 1, 1], [], []>} : vector<8x256xbf16>, vector<256x256xbf16>, vector<8x256xf32> -> vector<8x256xf32>
    %49 = arith.addf %46, %48 : vector<8x256xf32>
    %50 = math.tanh %49 : vector<8x256xf32>
    %c4 = arith.constant 4 : index
    %c0_23 = arith.constant 0 : index
    %c0_24 = arith.constant 0 : index
    %51 = vector.load %arg9[%c4, %c0_23, %c0_24] : memref<8x8x256xf32, #tpu.memory_space<vmem>>, vector<1x8x256xf32>
    %52 = vector.shape_cast %51 : vector<1x8x256xf32> to vector<8x256xf32>
    %53 = vector.shape_cast %50 : vector<8x256xf32> to vector<1x8x256xf32>
    tpu.vector_store %arg9[%c4, %c0_23, %c0_24], %53 {strides = array<i32>} : memref<8x8x256xf32, #tpu.memory_space<vmem>>, vector<1x8x256xf32>,
    %54 = vector.extract_strided_slice %6 {offsets = [5, 0, 0], sizes = [1, 8, 256], strides = [1, 1, 1]} : vector<8x8x256xf32> to vector<1x8x256xf32>
    %55 = vector.shape_cast %54 : vector<1x8x256xf32> to vector<8x256xf32>
    %56 = arith.truncf %50 : vector<8x256xf32> to vector<8x256xbf16>
    %cst_25 = arith.constant dense<0.000000e+00> : vector<8x256xf32>
    %57 = tpu.matmul %56, %7, %cst_25 {dimension_numbers = #tpu.dot_dimension_numbers<[1], [0], [0], [1], [0, 0, 1, 1], [], []>} : vector<8x256xbf16>, vector<256x256xbf16>, vector<8x256xf32> -> vector<8x256xf32>
    %58 = arith.addf %55, %57 : vector<8x256xf32>
    %59 = math.tanh %58 : vector<8x256xf32>
    %c5 = arith.constant 5 : index
    %c0_26 = arith.constant 0 : index
    %c0_27 = arith.constant 0 : index
    %60 = vector.load %arg9[%c5, %c0_26, %c0_27] : memref<8x8x256xf32, #tpu.memory_space<vmem>>, vector<1x8x256xf32>
    %61 = vector.shape_cast %60 : vector<1x8x256xf32> to vector<8x256xf32>
    %62 = vector.shape_cast %59 : vector<8x256xf32> to vector<1x8x256xf32>
    tpu.vector_store %arg9[%c5, %c0_26, %c0_27], %62 {strides = array<i32>} : memref<8x8x256xf32, #tpu.memory_space<vmem>>, vector<1x8x256xf32>,
    %63 = vector.extract_strided_slice %6 {offsets = [6, 0, 0], sizes = [1, 8, 256], strides = [1, 1, 1]} : vector<8x8x256xf32> to vector<1x8x256xf32>
    %64 = vector.shape_cast %63 : vector<1x8x256xf32> to vector<8x256xf32>
    %65 = arith.truncf %59 : vector<8x256xf32> to vector<8x256xbf16>
    %cst_28 = arith.constant dense<0.000000e+00> : vector<8x256xf32>
    %66 = tpu.matmul %65, %7, %cst_28 {dimension_numbers = #tpu.dot_dimension_numbers<[1], [0], [0], [1], [0, 0, 1, 1], [], []>} : vector<8x256xbf16>, vector<256x256xbf16>, vector<8x256xf32> -> vector<8x256xf32>
    %67 = arith.addf %64, %66 : vector<8x256xf32>
    %68 = math.tanh %67 : vector<8x256xf32>
    %c6 = arith.constant 6 : index
    %c0_29 = arith.constant 0 : index
    %c0_30 = arith.constant 0 : index
    %69 = vector.load %arg9[%c6, %c0_29, %c0_30] : memref<8x8x256xf32, #tpu.memory_space<vmem>>, vector<1x8x256xf32>
    %70 = vector.shape_cast %69 : vector<1x8x256xf32> to vector<8x256xf32>
    %71 = vector.shape_cast %68 : vector<8x256xf32> to vector<1x8x256xf32>
    tpu.vector_store %arg9[%c6, %c0_29, %c0_30], %71 {strides = array<i32>} : memref<8x8x256xf32, #tpu.memory_space<vmem>>, vector<1x8x256xf32>,
    %72 = vector.extract_strided_slice %6 {offsets = [7, 0, 0], sizes = [1, 8, 256], strides = [1, 1, 1]} : vector<8x8x256xf32> to vector<1x8x256xf32>
    %73 = vector.shape_cast %72 : vector<1x8x256xf32> to vector<8x256xf32>
    %74 = arith.truncf %68 : vector<8x256xf32> to vector<8x256xbf16>
    %cst_31 = arith.constant dense<0.000000e+00> : vector<8x256xf32>
    %75 = tpu.matmul %74, %7, %cst_31 {dimension_numbers = #tpu.dot_dimension_numbers<[1], [0], [0], [1], [0, 0, 1, 1], [], []>} : vector<8x256xbf16>, vector<256x256xbf16>, vector<8x256xf32> -> vector<8x256xf32>
    %76 = arith.addf %73, %75 : vector<8x256xf32>
    %77 = math.tanh %76 : vector<8x256xf32>
    %c7 = arith.constant 7 : index
    %c0_32 = arith.constant 0 : index
    %c0_33 = arith.constant 0 : index
    %78 = vector.load %arg9[%c7, %c0_32, %c0_33] : memref<8x8x256xf32, #tpu.memory_space<vmem>>, vector<1x8x256xf32>
    %79 = vector.shape_cast %78 : vector<1x8x256xf32> to vector<8x256xf32>
    %80 = vector.shape_cast %77 : vector<8x256xf32> to vector<1x8x256xf32>
    tpu.vector_store %arg9[%c7, %c0_32, %c0_33], %80 {strides = array<i32>} : memref<8x8x256xf32, #tpu.memory_space<vmem>>, vector<1x8x256xf32>,
    %c0_34 = arith.constant 0 : index
    %c0_35 = arith.constant 0 : index
    %81 = vector.load %arg8[%c0_34, %c0_35] : memref<8x256xf32, #tpu.memory_space<vmem>>, vector<8x256xf32>
    tpu.vector_store %arg8[%c0_34, %c0_35], %77 {strides = array<i32>} : memref<8x256xf32, #tpu.memory_space<vmem>>, vector<8x256xf32>,
    tpu.wait_dma2 semaphore(%arg11 : memref<!tpu.dma_semaphore, #tpu.memory_space<semaphore_mem>>) src(%arg6 : memref<256x128xbf16, #tpu.memory_space<any>>) dst(%arg10 : memref<256x128xbf16, #tpu.memory_space<vmem>>)
    %c0_36 = arith.constant 0 : index
    %c0_37 = arith.constant 0 : index
    %c0_38 = arith.constant 0 : index
    %82 = vector.load %arg9[%c0_36, %c0_37, %c0_38] : memref<8x8x256xf32, #tpu.memory_space<vmem>>, vector<8x8x256xf32>
    %83 = arith.truncf %82 : vector<8x8x256xf32> to vector<8x8x256xbf16>
    %84 = vector.shape_cast %83 : vector<8x8x256xbf16> to vector<64x256xbf16>
    %c0_39 = arith.constant 0 : index
    %c0_40 = arith.constant 0 : index
    %85 = vector.load %arg10[%c0_39, %c0_40] : memref<256x128xbf16, #tpu.memory_space<vmem>>, vector<256x128xbf16>
    %cst_41 = arith.constant dense<0.000000e+00> : vector<64x128xf32>
    %86 = tpu.matmul %84, %85, %cst_41 {dimension_numbers = #tpu.dot_dimension_numbers<[1], [0], [0], [1], [0, 0, 1, 1], [], []>} : vector<64x256xbf16>, vector<256x128xbf16>, vector<64x128xf32> -> vector<64x128xf32>
    %c0_42 = arith.constant 0 : index
    %c0_43 = arith.constant 0 : index
    %87 = vector.load %arg5[%c0_42, %c0_43] : memref<1x128xf32, #tpu.memory_space<vmem>>, vector<1x128xf32>
    %88 = vector.broadcast %87 : vector<1x128xf32> to vector<64x128xf32>
    %89 = arith.addf %86, %88 : vector<64x128xf32>
    %c0_44 = arith.constant 0 : index
    %c0_45 = arith.constant 0 : index
    %90 = vector.load %arg7[%c0_44, %c0_45] : memref<64x128xf32, #tpu.memory_space<vmem>>, vector<64x128xf32>
    tpu.vector_store %arg7[%c0_44, %c0_45], %89 {strides = array<i32>} : memref<64x128xf32, #tpu.memory_space<vmem>>, vector<64x128xf32>,
    return
  }
}

</mosaic_0001>

<llo_original>
// kernel: rnn_forward.1
$region0: #{rnn_forward.1}
  #allocation0 [shape = 'u32[]', space=smem, size = 0x4, offset = 0x4, fixed_abs, tag = 'smem constant byte address 0x4 - core index']
  #allocation1 [shape = 'u32[144,128]{1,0:T(1,128)}', space=vmem, size = 0x12000, scoped, tag = 'internal scratch']
  #allocation2 [shape = 'f32[8,8,256]{2,1,0:T(8,128)}', space=vmem, size = 0x10000, scoped, tag = 'scratch operand']
  #allocation3 [shape = 'bf16[256,128]{1,0:T(16,128)(2,1)}', space=vmem, size = 0x10000, scoped, tag = 'scratch operand']
  #allocation4 [shape = 's32[1]{0}', space=sflag, size = 0x4, scoped, tag = 'scratch operand']
  #allocation5 [shape = 's32[]', space=sflag, size = 0x4, offset = 0, fixed_abs, tag = 'sflag constant byte address 0x0 - dummy sync flag']
  %s0 = inlined_call_operand.vmem [shape: bf16[64,128], index: 0, kind: input, shape index: {}]
  %s1 = inlined_call_operand.vmem [shape: f32[8,256], index: 1, kind: input, shape index: {}]
  %s2 = inlined_call_operand.vmem [shape: bf16[128,256], index: 2, kind: input, shape index: {}]
  %s3 = inlined_call_operand.vmem [shape: bf16[256,256], index: 3, kind: input, shape index: {}]
  %s4 = inlined_call_operand.vmem [shape: f32[1,256], index: 4, kind: input, shape index: {}]
  %s5 = inlined_call_operand.vmem [shape: f32[1,128], index: 5, kind: input, shape index: {}]
  %s6 = inlined_call_operand.vmem [shape: bf16[256,128], index: 6, kind: input, shape index: {}]
  %s7 = inlined_call_operand.vmem [shape: f32[64,128], index: 7, kind: output, shape index: {0}]
  %s8 = inlined_call_operand.vmem [shape: f32[8,256], index: 8, kind: output, shape index: {1}]
  %9 = xla_tuple %s7, %s8
  %s10 = sld [smem:[#allocation0]]
  $region76: #{rnn_forward.1} parent=0
    _
  %s12 = ssub.s32 1, %s10
  %s13 = scalar_select 0, %s12, %s10
  // Predicated region
  $region2: #{rnn_forward.1} parent=0 // pred_check
    _
  $region3: #{rnn_forward.1} parent=0 // pred_check_branch
    %15 = sbr.rel (0) target = $region5
  $region4: #{rnn_forward.1} parent=0 // pred_region
    _
  $region5: #{rnn_forward.1} parent=0 // pred_fallthru
    _
  // Predicated region
  $region6: #{rnn_forward.1} parent=0 // pred_check
    _
  $region7: #{rnn_forward.1} parent=0 // pred_check_branch
    %17 = sbr.rel (0) target = $region9
  $region8: #{rnn_forward.1} parent=0 // pred_region
    _
  $region9: #{rnn_forward.1} parent=0 // pred_fallthru
    _
  // Predicated region
  $region10: #{rnn_forward.1} parent=0 // pred_check
    _
  $region11: #{rnn_forward.1} parent=0 // pred_check_branch
    %19 = sbr.rel (0) target = $region13
  $region12: #{rnn_forward.1} parent=0 // pred_region
    _
  $region13: #{rnn_forward.1} parent=0 // pred_fallthru
    _
  // Predicated region
  $region14: #{rnn_forward.1} parent=0 // pred_check
    _
  $region15: #{rnn_forward.1} parent=0 // pred_check_branch
    %21 = sbr.rel (0) target = $region17
  $region16: #{rnn_forward.1} parent=0 // pred_region
    _
  $region17: #{rnn_forward.1} parent=0 // pred_fallthru
    _
  // Predicated region
  $region18: #{rnn_forward.1} parent=0 // pred_check
    _
  $region19: #{rnn_forward.1} parent=0 // pred_check_branch
    %23 = sbr.rel (0) target = $region21
  $region20: #{rnn_forward.1} parent=0 // pred_region
    _
  $region21: #{rnn_forward.1} parent=0 // pred_fallthru
    _
  // Predicated region
  $region22: #{rnn_forward.1} parent=0 // pred_check
    _
  $region23: #{rnn_forward.1} parent=0 // pred_check_branch
    %25 = sbr.rel (0) target = $region25
  $region24: #{rnn_forward.1} parent=0 // pred_region
    _
  $region25: #{rnn_forward.1} parent=0 // pred_fallthru
    _
  %p28 = scmp.lt.u32.totalorder 128, 8
  %p29 = pneg %p28
  // Predicated region
  $region26: #{rnn_forward.1} parent=0 // pred_check
    _
  $region27: #{rnn_forward.1} parent=0 // pred_check_branch
    %31 = sbr.rel (%p28) target = $region29
  $region28: #{rnn_forward.1} parent=0 // pred_region
    %s46 = sand.u32 128, 7
    %p47 = scmp.eq.s32.totalorder %s46, 0
    // Predicated region
    $region41: #{rnn_forward.1} parent=28 // pred_check
      %p48 = pneg %p47
    $region42: #{rnn_forward.1} parent=28 // pred_check_branch
      %50 = sbr.rel (%p48) target = $region44
    $region43: #{rnn_forward.1} parent=28 // pred_region
      loop: start=0, step=1, limit=1
      $region45: #{rnn_forward.1} parent=43 // loop_pre_header
        _
      $region46: #{rnn_forward.1} parent=43 // loop_header
        %s52 = sphi 0, %s56
        %p53 = scmp.ge.s32.totalorder %s52, 1
        %s57 = sphi %s6, %s6
        %s58 = sphi [#allocation3], [#allocation3]
      $region47: #{rnn_forward.1} parent=43 // loop_header_branch
        %55 = sbr.rel (%p53) target = $region51
      $region48: #{rnn_forward.1} parent=43 // loop_body
        %v59 = vld [vmem:[%s57] sm:$0xff]
        %60 = vst [vmem:[%s58] sm:$0xff] %v59
        %v61 = vld [vmem:[%s57 + $0x8] sm:$0xff]
        %62 = vst [vmem:[%s58 + $0x8] sm:$0xff] %v61
        %v63 = vld [vmem:[%s57 + $0x10] sm:$0xff]
        %64 = vst [vmem:[%s58 + $0x10] sm:$0xff] %v63
        %v65 = vld [vmem:[%s57 + $0x18] sm:$0xff]
        %66 = vst [vmem:[%s58 + $0x18] sm:$0xff] %v65
        %v67 = vld [vmem:[%s57 + $0x20] sm:$0xff]
        %68 = vst [vmem:[%s58 + $0x20] sm:$0xff] %v67
        %v69 = vld [vmem:[%s57 + $0x28] sm:$0xff]
        %70 = vst [vmem:[%s58 + $0x28] sm:$0xff] %v69
        %v71 = vld [vmem:[%s57 + $0x30] sm:$0xff]
        %72 = vst [vmem:[%s58 + $0x30] sm:$0xff] %v71
        %v73 = vld [vmem:[%s57 + $0x38] sm:$0xff]
        %74 = vst [vmem:[%s58 + $0x38] sm:$0xff] %v73
        %v75 = vld [vmem:[%s57 + $0x40] sm:$0xff]
        %76 = vst [vmem:[%s58 + $0x40] sm:$0xff] %v75
        %v77 = vld [vmem:[%s57 + $0x48] sm:$0xff]
        %78 = vst [vmem:[%s58 + $0x48] sm:$0xff] %v77
        %v79 = vld [vmem:[%s57 + $0x50] sm:$0xff]
        %80 = vst [vmem:[%s58 + $0x50] sm:$0xff] %v79
        %v81 = vld [vmem:[%s57 + $0x58] sm:$0xff]
        %82 = vst [vmem:[%s58 + $0x58] sm:$0xff] %v81
        %v83 = vld [vmem:[%s57 + $0x60] sm:$0xff]
        %84 = vst [vmem:[%s58 + $0x60] sm:$0xff] %v83
        %v85 = vld [vmem:[%s57 + $0x68] sm:$0xff]
        %86 = vst [vmem:[%s58 + $0x68] sm:$0xff] %v85
        %v87 = vld [vmem:[%s57 + $0x70] sm:$0xff]
        %88 = vst [vmem:[%s58 + $0x70] sm:$0xff] %v87
        %v89 = vld [vmem:[%s57 + $0x78] sm:$0xff]
        %90 = vst [vmem:[%s58 + $0x78] sm:$0xff] %v89
      $region49: #{rnn_forward.1} parent=43 // loop_footer
        %s56 = sadd.s32 1, %s52
      $region50: #{rnn_forward.1} parent=43 // loop_footer_branch
        %51 = sbr.rel target = $region46
      $region51: #{rnn_forward.1} parent=43 // loop_exit
        _
    $region44: #{rnn_forward.1} parent=28 // pred_fallthru
      _
    %p91 = pneg %p47
    // Predicated region
    $region52: #{rnn_forward.1} parent=28 // pred_check
      _
    $region53: #{rnn_forward.1} parent=28 // pred_check_branch
      %93 = sbr.rel (%p47) target = $region55
    $region54: #{rnn_forward.1} parent=28 // pred_region
      %s94 = sand.u32 128, 7
    $region55: #{rnn_forward.1} parent=28 // pred_fallthru
      _
  $region29: #{rnn_forward.1} parent=0 // pred_fallthru
    _
  // Predicated region
  $region30: #{rnn_forward.1} parent=0 // pred_check
    %p32 = pneg %p28
  $region31: #{rnn_forward.1} parent=0 // pred_check_branch
    %34 = sbr.rel (%p32) target = $region33
  $region32: #{rnn_forward.1} parent=0 // pred_region
    %s35 = sshllo.u32 0, 128
    loop: start=0, step=1, limit=1
    $region34: #{rnn_forward.1} parent=32 // loop_pre_header
      _
    $region35: #{rnn_forward.1} parent=32 // loop_header
      %s37 = sphi 0, %s41
      %p38 = scmp.ge.s32.totalorder %s37, 1
      %s42 = sphi %s6, %s6
      %s43 = sphi [#allocation3], [#allocation3]
    $region36: #{rnn_forward.1} parent=32 // loop_header_branch
      %40 = sbr.rel (%p38) target = $region40
    $region37: #{rnn_forward.1} parent=32 // loop_body
      %v44 = vld [vmem:[%s42] sm:%s35]
      %45 = vst [vmem:[%s43] sm:%s35] %v44
    $region38: #{rnn_forward.1} parent=32 // loop_footer
      %s41 = sadd.s32 1, %s37
    $region39: #{rnn_forward.1} parent=32 // loop_footer_branch
      %36 = sbr.rel target = $region35
    $region40: #{rnn_forward.1} parent=32 // loop_exit
      _
  $region33: #{rnn_forward.1} parent=0 // pred_fallthru
    _
  // Predicated region
  $region56: #{rnn_forward.1} parent=0 // pred_check
    _
  $region57: #{rnn_forward.1} parent=0 // pred_check_branch
    %97 = sbr.rel (0) target = $region59
  $region58: #{rnn_forward.1} parent=0 // pred_region
    %98 = vsyncadd [#allocation4], 2048
  $region59: #{rnn_forward.1} parent=0 // pred_fallthru
    _
  %v99 = vld [vmem:[%s0] sm:$0xf]
  %v100 = vld [vmem:[%s0 + $0x4] sm:$0xf]
  %v101 = vld [vmem:[%s0 + $0x8] sm:$0xf]
  %v102 = vld [vmem:[%s0 + $0xc] sm:$0xf]
  %v103 = vld [vmem:[%s0 + $0x10] sm:$0xf]
  %v104 = vld [vmem:[%s0 + $0x14] sm:$0xf]
  %v105 = vld [vmem:[%s0 + $0x18] sm:$0xf]
  %v106 = vld [vmem:[%s0 + $0x1c] sm:$0xf]
  %v107 = vld [vmem:[%s2] sm:$0xff]
  %v108 = vld [vmem:[%s2 + $0x8] sm:$0xff]
  %v109 = vld [vmem:[%s2 + $0x10] sm:$0xff]
  %v110 = vld [vmem:[%s2 + $0x18] sm:$0xff]
  %v111 = vld [vmem:[%s2 + $0x20] sm:$0xff]
  %v112 = vld [vmem:[%s2 + $0x28] sm:$0xff]
  %v113 = vld [vmem:[%s2 + $0x30] sm:$0xff]
  %v114 = vld [vmem:[%s2 + $0x38] sm:$0xff]
  %v115 = vld [vmem:[%s2 + $0x40] sm:$0xff]
  %v116 = vld [vmem:[%s2 + $0x48] sm:$0xff]
  %v117 = vld [vmem:[%s2 + $0x50] sm:$0xff]
  %v118 = vld [vmem:[%s2 + $0x58] sm:$0xff]
  %v119 = vld [vmem:[%s2 + $0x60] sm:$0xff]
  %v120 = vld [vmem:[%s2 + $0x68] sm:$0xff]
  %v121 = vld [vmem:[%s2 + $0x70] sm:$0xff]
  %v122 = vld [vmem:[%s2 + $0x78] sm:$0xff]
  %v123 = vld [vmem:[%s4] sm:$0x3]
  %v125 = vlaneseq
  %v126 = vshrl.u32 %v125, 7
  %v127 = vsub.s32 0, %v126
  %v128 = vrot.slane %v123, %v127
  %v129 = vlaneseq
  %v130 = vshrl.u32 %v129, 7
  %v131 = vsub.s32 1, %v130
  %v132 = vrot.slane %v123, %v131
  %v143 = vunpack.c.l.b16 %v99
  %v144 = vunpack.c.l.b16 %v100
  %v145 = vunpack.c.l.b16 %v101
  %v146 = vunpack.c.l.b16 %v102
  %v147 = vunpack.c.l.b16 %v103
  %v148 = vunpack.c.l.b16 %v104
  %v149 = vunpack.c.l.b16 %v105
  %v150 = vunpack.c.l.b16 %v106
  %v151 = vpack.c.b16 %v144, %v143
  %v152 = vpack.c.b16 %v146, %v145
  %v153 = vpack.c.b16 %v148, %v147
  %v154 = vpack.c.b16 %v150, %v149
  %v175 = vunpack.c.l.b16 %v107
  %v176 = vunpack.c.h.b16 %v107
  %v177 = vunpack.c.l.b16 %v108
  %v178 = vunpack.c.h.b16 %v108
  %v179 = vunpack.c.l.b16 %v109
  %v180 = vunpack.c.h.b16 %v109
  %v181 = vunpack.c.l.b16 %v110
  %v182 = vunpack.c.h.b16 %v110
  %v183 = vunpack.c.l.b16 %v111
  %v184 = vunpack.c.h.b16 %v111
  %v185 = vunpack.c.l.b16 %v112
  %v186 = vunpack.c.h.b16 %v112
  %v187 = vunpack.c.l.b16 %v113
  %v188 = vunpack.c.h.b16 %v113
  %v189 = vunpack.c.l.b16 %v114
  %v190 = vunpack.c.h.b16 %v114
  %v191 = vunpack.c.l.b16 %v115
  %v192 = vunpack.c.h.b16 %v115
  %v193 = vunpack.c.l.b16 %v116
  %v194 = vunpack.c.h.b16 %v116
  %v195 = vunpack.c.l.b16 %v117
  %v196 = vunpack.c.h.b16 %v117
  %v197 = vunpack.c.l.b16 %v118
  %v198 = vunpack.c.h.b16 %v118
  %v199 = vunpack.c.l.b16 %v119
  %v200 = vunpack.c.h.b16 %v119
  %v201 = vunpack.c.l.b16 %v120
  %v202 = vunpack.c.h.b16 %v120
  %v203 = vunpack.c.l.b16 %v121
  %v204 = vunpack.c.h.b16 %v121
  %v205 = vunpack.c.l.b16 %v122
  %v206 = vunpack.c.h.b16 %v122
  %v207 = vpack.c.b16 %v177, %v175
  %v208 = vpack.c.b16 %v178, %v176
  %v209 = vpack.c.b16 %v181, %v179
  %v210 = vpack.c.b16 %v182, %v180
  %v211 = vpack.c.b16 %v185, %v183
  %v212 = vpack.c.b16 %v186, %v184
  %v213 = vpack.c.b16 %v189, %v187
  %v214 = vpack.c.b16 %v190, %v188
  %v215 = vpack.c.b16 %v193, %v191
  %v216 = vpack.c.b16 %v194, %v192
  %v217 = vpack.c.b16 %v197, %v195
  %v218 = vpack.c.b16 %v198, %v196
  %v219 = vpack.c.b16 %v201, %v199
  %v220 = vpack.c.b16 %v202, %v200
  %v221 = vpack.c.b16 %v205, %v203
  %v222 = vpack.c.b16 %v206, %v204
  %239 = vmatprep.subr.bf16.mxu0 %v208
  %240 = vmatpush1.bf16.msra.mxu0 %v207
  %241 = vmatprep.subr.bf16.mxu0 %v210
  %242 = vmatpush1.bf16.msra.mxu0 %v209
  %243 = vmatprep.subr.bf16.mxu0 %v212
  %244 = vmatpush1.bf16.msra.mxu0 %v211
  %245 = vmatprep.subr.bf16.mxu0 %v214
  %246 = vmatpush1.bf16.msra.mxu0 %v213
  %247 = vmatprep.subr.bf16.mxu0 %v216
  %248 = vmatpush1.bf16.msra.mxu0 %v215
  %249 = vmatprep.subr.bf16.mxu0 %v218
  %250 = vmatpush1.bf16.msra.mxu0 %v217
  %251 = vmatprep.subr.bf16.mxu0 %v220
  %252 = vmatpush1.bf16.msra.mxu0 %v219
  %253 = vmatprep.subr.bf16.mxu0 %v222
  %254 = vmatpush1.bf16.msra.mxu0 %v221
  %255 = vmatprep.subr.bf16.mxu0 0
  %256 = vmatpush1.bf16.msra.mxu0 0
  %257 = vmatprep.subr.bf16.mxu0 0
  %258 = vmatpush1.bf16.msra.mxu0 0
  %259 = vmatprep.subr.bf16.mxu0 0
  %260 = vmatpush1.bf16.msra.mxu0 0
  %261 = vmatprep.subr.bf16.mxu0 0
  %262 = vmatpush1.bf16.msra.mxu0 0
  %263 = vmatprep.subr.bf16.mxu0 0
  %264 = vmatpush1.bf16.msra.mxu0 0
  %265 = vmatprep.subr.bf16.mxu0 0
  %266 = vmatpush1.bf16.msra.mxu0 0
  %267 = vmatprep.subr.bf16.mxu0 0
  %268 = vmatpush1.bf16.msra.mxu0 0
  %269 = vmatprep.subr.bf16.mxu0 0
  %270 = vmatpush1.bf16.msra.mxu0 0
  %271 = vmatprep.mubr.bf16.mxu0 0
  %272 = vmatmul.mubr.bf16.gmra.mrb[0].mxu0 %v151
  %v273 = vpop.f32.mrb[0].mxu0
  %v274 = vadd.f32 %v128, %v273
  %v275 = vpop.f32.mrb[0].mxu0
  %v276 = vadd.f32 %v132, %v275
  %v277 = vpop.f32.mrb[0].mxu0
  %v278 = vadd.f32 %v128, %v277
  %v279 = vpop.f32.mrb[0].mxu0
  %v280 = vadd.f32 %v132, %v279
  %281 = vmatprep.mubr.bf16.mxu0 0
  %282 = vmatmul.mubr.bf16.gmra.mrb[0].mxu0 %v152
  %v283 = vpop.f32.mrb[0].mxu0
  %v284 = vadd.f32 %v128, %v283
  %v285 = vpop.f32.mrb[0].mxu0
  %v286 = vadd.f32 %v132, %v285
  %v287 = vpop.f32.mrb[0].mxu0
  %v288 = vadd.f32 %v128, %v287
  %v289 = vpop.f32.mrb[0].mxu0
  %v290 = vadd.f32 %v132, %v289
  %291 = vmatprep.mubr.bf16.mxu0 0
  %292 = vmatmul.mubr.bf16.gmra.mrb[0].mxu0 %v153
  %v293 = vpop.f32.mrb[0].mxu0
  %v294 = vadd.f32 %v128, %v293
  %v295 = vpop.f32.mrb[0].mxu0
  %v296 = vadd.f32 %v132, %v295
  %v297 = vpop.f32.mrb[0].mxu0
  %v298 = vadd.f32 %v128, %v297
  %v299 = vpop.f32.mrb[0].mxu0
  %v300 = vadd.f32 %v132, %v299
  %301 = vmatprep.mubr.bf16.mxu0 0
  %302 = vmatmul.mubr.bf16.gmra.mrb[0].mxu0 %v154
  %v303 = vpop.f32.mrb[0].mxu0
  %v304 = vadd.f32 %v128, %v303
  %v305 = vpop.f32.mrb[0].mxu0
  %v306 = vadd.f32 %v132, %v305
  %v307 = vpop.f32.mrb[0].mxu0
  %v308 = vadd.f32 %v128, %v307
  %v309 = vpop.f32.mrb[0].mxu0
  %v310 = vadd.f32 %v132, %v309
  %311 = vdwg.mxu0
  %v312 = vld [vmem:[%s3] sm:$0xff]
  %v313 = vld [vmem:[%s3 + $0x8] sm:$0xff]
  %v314 = vld [vmem:[%s3 + $0x10] sm:$0xff]
  %v315 = vld [vmem:[%s3 + $0x18] sm:$0xff]
  %v316 = vld [vmem:[%s3 + $0x20] sm:$0xff]
  %v317 = vld [vmem:[%s3 + $0x28] sm:$0xff]
  %v318 = vld [vmem:[%s3 + $0x30] sm:$0xff]
  %v319 = vld [vmem:[%s3 + $0x38] sm:$0xff]
  %v320 = vld [vmem:[%s3 + $0x40] sm:$0xff]
  %v321 = vld [vmem:[%s3 + $0x48] sm:$0xff]
  %v322 = vld [vmem:[%s3 + $0x50] sm:$0xff]
  %v323 = vld [vmem:[%s3 + $0x58] sm:$0xff]
  %v324 = vld [vmem:[%s3 + $0x60] sm:$0xff]
  %v325 = vld [vmem:[%s3 + $0x68] sm:$0xff]
  %v326 = vld [vmem:[%s3 + $0x70] sm:$0xff]
  %v327 = vld [vmem:[%s3 + $0x78] sm:$0xff]
  %v328 = vld [vmem:[%s3 + $0x80] sm:$0xff]
  %v329 = vld [vmem:[%s3 + $0x88] sm:$0xff]
  %v330 = vld [vmem:[%s3 + $0x90] sm:$0xff]
  %v331 = vld [vmem:[%s3 + $0x98] sm:$0xff]
  %v332 = vld [vmem:[%s3 + $0xa0] sm:$0xff]
  %v333 = vld [vmem:[%s3 + $0xa8] sm:$0xff]
  %v334 = vld [vmem:[%s3 + $0xb0] sm:$0xff]
  %v335 = vld [vmem:[%s3 + $0xb8] sm:$0xff]
  %v336 = vld [vmem:[%s3 + $0xc0] sm:$0xff]
  %v337 = vld [vmem:[%s3 + $0xc8] sm:$0xff]
  %v338 = vld [vmem:[%s3 + $0xd0] sm:$0xff]
  %v339 = vld [vmem:[%s3 + $0xd8] sm:$0xff]
  %v340 = vld [vmem:[%s3 + $0xe0] sm:$0xff]
  %v341 = vld [vmem:[%s3 + $0xe8] sm:$0xff]
  %v342 = vld [vmem:[%s3 + $0xf0] sm:$0xff]
  %v343 = vld [vmem:[%s3 + $0xf8] sm:$0xff]
  %v344 = vld [vmem:[%s1] sm:$0xff]
  %v345 = vld [vmem:[%s1 + $0x8] sm:$0xff]
  %v346 = vpack.c.bf16 %v344, %v344
  %v347 = vpack.c.bf16 %v345, %v345
  %v380 = vunpack.c.l.b16 %v312
  %v381 = vunpack.c.h.b16 %v312
  %v382 = vunpack.c.l.b16 %v313
  %v383 = vunpack.c.h.b16 %v313
  %v384 = vunpack.c.l.b16 %v314
  %v385 = vunpack.c.h.b16 %v314
  %v386 = vunpack.c.l.b16 %v315
  %v387 = vunpack.c.h.b16 %v315
  %v388 = vunpack.c.l.b16 %v316
  %v389 = vunpack.c.h.b16 %v316
  %v390 = vunpack.c.l.b16 %v317
  %v391 = vunpack.c.h.b16 %v317
  %v392 = vunpack.c.l.b16 %v318
  %v393 = vunpack.c.h.b16 %v318
  %v394 = vunpack.c.l.b16 %v319
  %v395 = vunpack.c.h.b16 %v319
  %v396 = vunpack.c.l.b16 %v320
  %v397 = vunpack.c.h.b16 %v320
  %v398 = vunpack.c.l.b16 %v321
  %v399 = vunpack.c.h.b16 %v321
  %v400 = vunpack.c.l.b16 %v322
  %v401 = vunpack.c.h.b16 %v322
  %v402 = vunpack.c.l.b16 %v323
  %v403 = vunpack.c.h.b16 %v323
  %v404 = vunpack.c.l.b16 %v324
  %v405 = vunpack.c.h.b16 %v324
  %v406 = vunpack.c.l.b16 %v325
  %v407 = vunpack.c.h.b16 %v325
  %v408 = vunpack.c.l.b16 %v326
  %v409 = vunpack.c.h.b16 %v326
  %v410 = vunpack.c.l.b16 %v327
  %v411 = vunpack.c.h.b16 %v327
  %v412 = vunpack.c.l.b16 %v328
  %v413 = vunpack.c.h.b16 %v328
  %v414 = vunpack.c.l.b16 %v329
  %v415 = vunpack.c.h.b16 %v329
  %v416 = vunpack.c.l.b16 %v330
  %v417 = vunpack.c.h.b16 %v330
  %v418 = vunpack.c.l.b16 %v331
  %v419 = vunpack.c.h.b16 %v331
  %v420 = vunpack.c.l.b16 %v332
  %v421 = vunpack.c.h.b16 %v332
  %v422 = vunpack.c.l.b16 %v333
  %v423 = vunpack.c.h.b16 %v333
  %v424 = vunpack.c.l.b16 %v334
  %v425 = vunpack.c.h.b16 %v334
  %v426 = vunpack.c.l.b16 %v335
  %v427 = vunpack.c.h.b16 %v335
  %v428 = vunpack.c.l.b16 %v336
  %v429 = vunpack.c.h.b16 %v336
  %v430 = vunpack.c.l.b16 %v337
  %v431 = vunpack.c.h.b16 %v337
  %v432 = vunpack.c.l.b16 %v338
  %v433 = vunpack.c.h.b16 %v338
  %v434 = vunpack.c.l.b16 %v339
  %v435 = vunpack.c.h.b16 %v339
  %v436 = vunpack.c.l.b16 %v340
  %v437 = vunpack.c.h.b16 %v340
  %v438 = vunpack.c.l.b16 %v341
  %v439 = vunpack.c.h.b16 %v341
  %v440 = vunpack.c.l.b16 %v342
  %v441 = vunpack.c.h.b16 %v342
  %v442 = vunpack.c.l.b16 %v343
  %v443 = vunpack.c.h.b16 %v343
  %v444 = vpack.c.b16 %v382, %v380
  %v445 = vpack.c.b16 %v383, %v381
  %v446 = vpack.c.b16 %v386, %v384
  %v447 = vpack.c.b16 %v387, %v385
  %v448 = vpack.c.b16 %v390, %v388
  %v449 = vpack.c.b16 %v391, %v389
  %v450 = vpack.c.b16 %v394, %v392
  %v451 = vpack.c.b16 %v395, %v393
  %v452 = vpack.c.b16 %v398, %v396
  %v453 = vpack.c.b16 %v399, %v397
  %v454 = vpack.c.b16 %v402, %v400
  %v455 = vpack.c.b16 %v403, %v401
  %v456 = vpack.c.b16 %v406, %v404
  %v457 = vpack.c.b16 %v407, %v405
  %v458 = vpack.c.b16 %v410, %v408
  %v459 = vpack.c.b16 %v411, %v409
  %v460 = vpack.c.b16 %v414, %v412
  %v461 = vpack.c.b16 %v415, %v413
  %v462 = vpack.c.b16 %v418, %v416
  %v463 = vpack.c.b16 %v419, %v417
  %v464 = vpack.c.b16 %v422, %v420
  %v465 = vpack.c.b16 %v423, %v421
  %v466 = vpack.c.b16 %v426, %v424
  %v467 = vpack.c.b16 %v427, %v425
  %v468 = vpack.c.b16 %v430, %v428
  %v469 = vpack.c.b16 %v431, %v429
  %v470 = vpack.c.b16 %v434, %v432
  %v471 = vpack.c.b16 %v435, %v433
  %v472 = vpack.c.b16 %v438, %v436
  %v473 = vpack.c.b16 %v439, %v437
  %v474 = vpack.c.b16 %v442, %v440
  %v475 = vpack.c.b16 %v443, %v441
  %508 = vmatprep.subr.bf16.mxu0 %v445
  %509 = vmatpush1.bf16.msra.mxu0 %v444
  %510 = vmatprep.subr.bf16.mxu0 %v447
  %511 = vmatpush1.bf16.msra.mxu0 %v446
  %512 = vmatprep.subr.bf16.mxu0 %v449
  %513 = vmatpush1.bf16.msra.mxu0 %v448
  %514 = vmatprep.subr.bf16.mxu0 %v451
  %515 = vmatpush1.bf16.msra.mxu0 %v450
  %516 = vmatprep.subr.bf16.mxu0 %v453
  %517 = vmatpush1.bf16.msra.mxu0 %v452
  %518 = vmatprep.subr.bf16.mxu0 %v455
  %519 = vmatpush1.bf16.msra.mxu0 %v454
  %520 = vmatprep.subr.bf16.mxu0 %v457
  %521 = vmatpush1.bf16.msra.mxu0 %v456
  %522 = vmatprep.subr.bf16.mxu0 %v459
  %523 = vmatpush1.bf16.msra.mxu0 %v458
  %524 = vmatprep.subr.bf16.mxu0 %v461
  %525 = vmatpush1.bf16.msra.mxu0 %v460
  %526 = vmatprep.subr.bf16.mxu0 %v463
  %527 = vmatpush1.bf16.msra.mxu0 %v462
  %528 = vmatprep.subr.bf16.mxu0 %v465
  %529 = vmatpush1.bf16.msra.mxu0 %v464
  %530 = vmatprep.subr.bf16.mxu0 %v467
  %531 = vmatpush1.bf16.msra.mxu0 %v466
  %532 = vmatprep.subr.bf16.mxu0 %v469
  %533 = vmatpush1.bf16.msra.mxu0 %v468
  %534 = vmatprep.subr.bf16.mxu0 %v471
  %535 = vmatpush1.bf16.msra.mxu0 %v470
  %536 = vmatprep.subr.bf16.mxu0 %v473
  %537 = vmatpush1.bf16.msra.mxu0 %v472
  %538 = vmatprep.subr.bf16.mxu0 %v475
  %539 = vmatpush1.bf16.msra.mxu0 %v474
  %540 = vmatprep.mubr.bf16.mxu0 %v347
  %541 = vmatmul.mubr.bf16.gmra.mrb[0].mxu0 %v346
  %v542 = vpop.f32.mrb[0].mxu0
  %v543 = vadd.f32 0.0, %v542
  %v544 = vpop.f32.mrb[0].mxu0
  %v545 = vadd.f32 0.0, %v544
  %v546 = vpop.f32.mrb[0].mxu0
  %v547 = vpop.f32.mrb[0].mxu0
  %548 = vdwg.mxu0
  %v549 = vadd.f32 %v274, %v543
  %v550 = vadd.f32 %v276, %v545
  %v551 = vtanh.pop %v549
  %v552 = vtanh.pop %v550
  %553 = vst [vmem:[#allocation2] sm:$0xff] %v551
  %554 = vst [vmem:[#allocation2 + $0x8] sm:$0xff] %v552
  %v555 = vpack.c.bf16 %v551, %v551
  %v556 = vpack.c.bf16 %v552, %v552
  %557 = vmatprep.subr.bf16.mxu0 %v445
  %558 = vmatpush1.bf16.msra.mxu0 %v444
  %559 = vmatprep.subr.bf16.mxu0 %v447
  %560 = vmatpush1.bf16.msra.mxu0 %v446
  %561 = vmatprep.subr.bf16.mxu0 %v449
  %562 = vmatpush1.bf16.msra.mxu0 %v448
  %563 = vmatprep.subr.bf16.mxu0 %v451
  %564 = vmatpush1.bf16.msra.mxu0 %v450
  %565 = vmatprep.subr.bf16.mxu0 %v453
  %566 = vmatpush1.bf16.msra.mxu0 %v452
  %567 = vmatprep.subr.bf16.mxu0 %v455
  %568 = vmatpush1.bf16.msra.mxu0 %v454
  %569 = vmatprep.subr.bf16.mxu0 %v457
  %570 = vmatpush1.bf16.msra.mxu0 %v456
  %571 = vmatprep.subr.bf16.mxu0 %v459
  %572 = vmatpush1.bf16.msra.mxu0 %v458
  %573 = vmatprep.subr.bf16.mxu0 %v461
  %574 = vmatpush1.bf16.msra.mxu0 %v460
  %575 = vmatprep.subr.bf16.mxu0 %v463
  %576 = vmatpush1.bf16.msra.mxu0 %v462
  %577 = vmatprep.subr.bf16.mxu0 %v465
  %578 = vmatpush1.bf16.msra.mxu0 %v464
  %579 = vmatprep.subr.bf16.mxu0 %v467
  %580 = vmatpush1.bf16.msra.mxu0 %v466
  %581 = vmatprep.subr.bf16.mxu0 %v469
  %582 = vmatpush1.bf16.msra.mxu0 %v468
  %583 = vmatprep.subr.bf16.mxu0 %v471
  %584 = vmatpush1.bf16.msra.mxu0 %v470
  %585 = vmatprep.subr.bf16.mxu0 %v473
  %586 = vmatpush1.bf16.msra.mxu0 %v472
  %587 = vmatprep.subr.bf16.mxu0 %v475
  %588 = vmatpush1.bf16.msra.mxu0 %v474
  %589 = vmatprep.mubr.bf16.mxu0 %v556
  %590 = vmatmul.mubr.bf16.gmra.mrb[0].mxu0 %v555
  %v591 = vpop.f32.mrb[0].mxu0
  %v592 = vadd.f32 0.0, %v591
  %v593 = vpop.f32.mrb[0].mxu0
  %v594 = vadd.f32 0.0, %v593
  %v595 = vpop.f32.mrb[0].mxu0
  %v596 = vpop.f32.mrb[0].mxu0
  %597 = vdwg.mxu0
  %v598 = vadd.f32 %v278, %v592
  %v599 = vadd.f32 %v280, %v594
  %v600 = vtanh.pop %v598
  %v601 = vtanh.pop %v599
  %s602 = scalar_lea.vmem [#allocation2], 16
  %603 = vst [vmem:[%s602] sm:$0xff] %v600
  %604 = vst [vmem:[%s602 + $0x8] sm:$0xff] %v601
  %v605 = vpack.c.bf16 %v600, %v600
  %v606 = vpack.c.bf16 %v601, %v601
  %607 = vmatprep.subr.bf16.mxu0 %v445
  %608 = vmatpush1.bf16.msra.mxu0 %v444
  %609 = vmatprep.subr.bf16.mxu0 %v447
  %610 = vmatpush1.bf16.msra.mxu0 %v446
  %611 = vmatprep.subr.bf16.mxu0 %v449
  %612 = vmatpush1.bf16.msra.mxu0 %v448
  %613 = vmatprep.subr.bf16.mxu0 %v451
  %614 = vmatpush1.bf16.msra.mxu0 %v450
  %615 = vmatprep.subr.bf16.mxu0 %v453
  %616 = vmatpush1.bf16.msra.mxu0 %v452
  %617 = vmatprep.subr.bf16.mxu0 %v455
  %618 = vmatpush1.bf16.msra.mxu0 %v454
  %619 = vmatprep.subr.bf16.mxu0 %v457
  %620 = vmatpush1.bf16.msra.mxu0 %v456
  %621 = vmatprep.subr.bf16.mxu0 %v459
  %622 = vmatpush1.bf16.msra.mxu0 %v458
  %623 = vmatprep.subr.bf16.mxu0 %v461
  %624 = vmatpush1.bf16.msra.mxu0 %v460
  %625 = vmatprep.subr.bf16.mxu0 %v463
  %626 = vmatpush1.bf16.msra.mxu0 %v462
  %627 = vmatprep.subr.bf16.mxu0 %v465
  %628 = vmatpush1.bf16.msra.mxu0 %v464
  %629 = vmatprep.subr.bf16.mxu0 %v467
  %630 = vmatpush1.bf16.msra.mxu0 %v466
  %631 = vmatprep.subr.bf16.mxu0 %v469
  %632 = vmatpush1.bf16.msra.mxu0 %v468
  %633 = vmatprep.subr.bf16.mxu0 %v471
  %634 = vmatpush1.bf16.msra.mxu0 %v470
  %635 = vmatprep.subr.bf16.mxu0 %v473
  %636 = vmatpush1.bf16.msra.mxu0 %v472
  %637 = vmatprep.subr.bf16.mxu0 %v475
  %638 = vmatpush1.bf16.msra.mxu0 %v474
  %639 = vmatprep.mubr.bf16.mxu0 %v606
  %640 = vmatmul.mubr.bf16.gmra.mrb[0].mxu0 %v605
  %v641 = vpop.f32.mrb[0].mxu0
  %v642 = vadd.f32 0.0, %v641
  %v643 = vpop.f32.mrb[0].mxu0
  %v644 = vadd.f32 0.0, %v643
  %v645 = vpop.f32.mrb[0].mxu0
  %v646 = vpop.f32.mrb[0].mxu0
  %647 = vdwg.mxu0
  %v648 = vadd.f32 %v284, %v642
  %v649 = vadd.f32 %v286, %v644
  %v650 = vtanh.pop %v648
  %v651 = vtanh.pop %v649
  %s652 = scalar_lea.vmem [#allocation2], 32
  %653 = vst [vmem:[%s652] sm:$0xff] %v650
  %654 = vst [vmem:[%s652 + $0x8] sm:$0xff] %v651
  %v655 = vpack.c.bf16 %v650, %v650
  %v656 = vpack.c.bf16 %v651, %v651
  %657 = vmatprep.subr.bf16.mxu0 %v445
  %658 = vmatpush1.bf16.msra.mxu0 %v444
  %659 = vmatprep.subr.bf16.mxu0 %v447
  %660 = vmatpush1.bf16.msra.mxu0 %v446
  %661 = vmatprep.subr.bf16.mxu0 %v449
  %662 = vmatpush1.bf16.msra.mxu0 %v448
  %663 = vmatprep.subr.bf16.mxu0 %v451
  %664 = vmatpush1.bf16.msra.mxu0 %v450
  %665 = vmatprep.subr.bf16.mxu0 %v453
  %666 = vmatpush1.bf16.msra.mxu0 %v452
  %667 = vmatprep.subr.bf16.mxu0 %v455
  %668 = vmatpush1.bf16.msra.mxu0 %v454
  %669 = vmatprep.subr.bf16.mxu0 %v457
  %670 = vmatpush1.bf16.msra.mxu0 %v456
  %671 = vmatprep.subr.bf16.mxu0 %v459
  %672 = vmatpush1.bf16.msra.mxu0 %v458
  %673 = vmatprep.subr.bf16.mxu0 %v461
  %674 = vmatpush1.bf16.msra.mxu0 %v460
  %675 = vmatprep.subr.bf16.mxu0 %v463
  %676 = vmatpush1.bf16.msra.mxu0 %v462
  %677 = vmatprep.subr.bf16.mxu0 %v465
  %678 = vmatpush1.bf16.msra.mxu0 %v464
  %679 = vmatprep.subr.bf16.mxu0 %v467
  %680 = vmatpush1.bf16.msra.mxu0 %v466
  %681 = vmatprep.subr.bf16.mxu0 %v469
  %682 = vmatpush1.bf16.msra.mxu0 %v468
  %683 = vmatprep.subr.bf16.mxu0 %v471
  %684 = vmatpush1.bf16.msra.mxu0 %v470
  %685 = vmatprep.subr.bf16.mxu0 %v473
  %686 = vmatpush1.bf16.msra.mxu0 %v472
  %687 = vmatprep.subr.bf16.mxu0 %v475
  %688 = vmatpush1.bf16.msra.mxu0 %v474
  %689 = vmatprep.mubr.bf16.mxu0 %v656
  %690 = vmatmul.mubr.bf16.gmra.mrb[0].mxu0 %v655
  %v691 = vpop.f32.mrb[0].mxu0
  %v692 = vadd.f32 0.0, %v691
  %v693 = vpop.f32.mrb[0].mxu0
  %v694 = vadd.f32 0.0, %v693
  %v695 = vpop.f32.mrb[0].mxu0
  %v696 = vpop.f32.mrb[0].mxu0
  %697 = vdwg.mxu0
  %v698 = vadd.f32 %v288, %v692
  %v699 = vadd.f32 %v290, %v694
  %v700 = vtanh.pop %v698
  %v701 = vtanh.pop %v699
  %s702 = scalar_lea.vmem [#allocation2], 48
  %703 = vst [vmem:[%s702] sm:$0xff] %v700
  %704 = vst [vmem:[%s702 + $0x8] sm:$0xff] %v701
  %v705 = vpack.c.bf16 %v700, %v700
  %v706 = vpack.c.bf16 %v701, %v701
  %707 = vmatprep.subr.bf16.mxu0 %v445
  %708 = vmatpush1.bf16.msra.mxu0 %v444
  %709 = vmatprep.subr.bf16.mxu0 %v447
  %710 = vmatpush1.bf16.msra.mxu0 %v446
  %711 = vmatprep.subr.bf16.mxu0 %v449
  %712 = vmatpush1.bf16.msra.mxu0 %v448
  %713 = vmatprep.subr.bf16.mxu0 %v451
  %714 = vmatpush1.bf16.msra.mxu0 %v450
  %715 = vmatprep.subr.bf16.mxu0 %v453
  %716 = vmatpush1.bf16.msra.mxu0 %v452
  %717 = vmatprep.subr.bf16.mxu0 %v455
  %718 = vmatpush1.bf16.msra.mxu0 %v454
  %719 = vmatprep.subr.bf16.mxu0 %v457
  %720 = vmatpush1.bf16.msra.mxu0 %v456
  %721 = vmatprep.subr.bf16.mxu0 %v459
  %722 = vmatpush1.bf16.msra.mxu0 %v458
  %723 = vmatprep.subr.bf16.mxu0 %v461
  %724 = vmatpush1.bf16.msra.mxu0 %v460
  %725 = vmatprep.subr.bf16.mxu0 %v463
  %726 = vmatpush1.bf16.msra.mxu0 %v462
  %727 = vmatprep.subr.bf16.mxu0 %v465
  %728 = vmatpush1.bf16.msra.mxu0 %v464
  %729 = vmatprep.subr.bf16.mxu0 %v467
  %730 = vmatpush1.bf16.msra.mxu0 %v466
  %731 = vmatprep.subr.bf16.mxu0 %v469
  %732 = vmatpush1.bf16.msra.mxu0 %v468
  %733 = vmatprep.subr.bf16.mxu0 %v471
  %734 = vmatpush1.bf16.msra.mxu0 %v470
  %735 = vmatprep.subr.bf16.mxu0 %v473
  %736 = vmatpush1.bf16.msra.mxu0 %v472
  %737 = vmatprep.subr.bf16.mxu0 %v475
  %738 = vmatpush1.bf16.msra.mxu0 %v474
  %739 = vmatprep.mubr.bf16.mxu0 %v706
  %740 = vmatmul.mubr.bf16.gmra.mrb[0].mxu0 %v705
  %v741 = vpop.f32.mrb[0].mxu0
  %v742 = vadd.f32 0.0, %v741
  %v743 = vpop.f32.mrb[0].mxu0
  %v744 = vadd.f32 0.0, %v743
  %v745 = vpop.f32.mrb[0].mxu0
  %v746 = vpop.f32.mrb[0].mxu0
  %747 = vdwg.mxu0
  %v748 = vadd.f32 %v294, %v742
  %v749 = vadd.f32 %v296, %v744
  %v750 = vtanh.pop %v748
  %v751 = vtanh.pop %v749
  %s752 = scalar_lea.vmem [#allocation2], 64
  %753 = vst [vmem:[%s752] sm:$0xff] %v750
  %754 = vst [vmem:[%s752 + $0x8] sm:$0xff] %v751
  %v755 = vpack.c.bf16 %v750, %v750
  %v756 = vpack.c.bf16 %v751, %v751
  %757 = vmatprep.subr.bf16.mxu0 %v445
  %758 = vmatpush1.bf16.msra.mxu0 %v444
  %759 = vmatprep.subr.bf16.mxu0 %v447
  %760 = vmatpush1.bf16.msra.mxu0 %v446
  %761 = vmatprep.subr.bf16.mxu0 %v449
  %762 = vmatpush1.bf16.msra.mxu0 %v448
  %763 = vmatprep.subr.bf16.mxu0 %v451
  %764 = vmatpush1.bf16.msra.mxu0 %v450
  %765 = vmatprep.subr.bf16.mxu0 %v453
  %766 = vmatpush1.bf16.msra.mxu0 %v452
  %767 = vmatprep.subr.bf16.mxu0 %v455
  %768 = vmatpush1.bf16.msra.mxu0 %v454
  %769 = vmatprep.subr.bf16.mxu0 %v457
  %770 = vmatpush1.bf16.msra.mxu0 %v456
  %771 = vmatprep.subr.bf16.mxu0 %v459
  %772 = vmatpush1.bf16.msra.mxu0 %v458
  %773 = vmatprep.subr.bf16.mxu0 %v461
  %774 = vmatpush1.bf16.msra.mxu0 %v460
  %775 = vmatprep.subr.bf16.mxu0 %v463
  %776 = vmatpush1.bf16.msra.mxu0 %v462
  %777 = vmatprep.subr.bf16.mxu0 %v465
  %778 = vmatpush1.bf16.msra.mxu0 %v464
  %779 = vmatprep.subr.bf16.mxu0 %v467
  %780 = vmatpush1.bf16.msra.mxu0 %v466
  %781 = vmatprep.subr.bf16.mxu0 %v469
  %782 = vmatpush1.bf16.msra.mxu0 %v468
  %783 = vmatprep.subr.bf16.mxu0 %v471
  %784 = vmatpush1.bf16.msra.mxu0 %v470
  %785 = vmatprep.subr.bf16.mxu0 %v473
  %786 = vmatpush1.bf16.msra.mxu0 %v472
  %787 = vmatprep.subr.bf16.mxu0 %v475
  %788 = vmatpush1.bf16.msra.mxu0 %v474
  %789 = vmatprep.mubr.bf16.mxu0 %v756
  %790 = vmatmul.mubr.bf16.gmra.mrb[0].mxu0 %v755
  %v791 = vpop.f32.mrb[0].mxu0
  %v792 = vadd.f32 0.0, %v791
  %v793 = vpop.f32.mrb[0].mxu0
  %v794 = vadd.f32 0.0, %v793
  %v795 = vpop.f32.mrb[0].mxu0
  %v796 = vpop.f32.mrb[0].mxu0
  %797 = vdwg.mxu0
  %v798 = vadd.f32 %v298, %v792
  %v799 = vadd.f32 %v300, %v794
  %v800 = vtanh.pop %v798
  %v801 = vtanh.pop %v799
  %s802 = scalar_lea.vmem [#allocation2], 80
  %803 = vst [vmem:[%s802] sm:$0xff] %v800
  %804 = vst [vmem:[%s802 + $0x8] sm:$0xff] %v801
  %v805 = vpack.c.bf16 %v800, %v800
  %v806 = vpack.c.bf16 %v801, %v801
  %807 = vmatprep.subr.bf16.mxu0 %v445
  %808 = vmatpush1.bf16.msra.mxu0 %v444
  %809 = vmatprep.subr.bf16.mxu0 %v447
  %810 = vmatpush1.bf16.msra.mxu0 %v446
  %811 = vmatprep.subr.bf16.mxu0 %v449
  %812 = vmatpush1.bf16.msra.mxu0 %v448
  %813 = vmatprep.subr.bf16.mxu0 %v451
  %814 = vmatpush1.bf16.msra.mxu0 %v450
  %815 = vmatprep.subr.bf16.mxu0 %v453
  %816 = vmatpush1.bf16.msra.mxu0 %v452
  %817 = vmatprep.subr.bf16.mxu0 %v455
  %818 = vmatpush1.bf16.msra.mxu0 %v454
  %819 = vmatprep.subr.bf16.mxu0 %v457
  %820 = vmatpush1.bf16.msra.mxu0 %v456
  %821 = vmatprep.subr.bf16.mxu0 %v459
  %822 = vmatpush1.bf16.msra.mxu0 %v458
  %823 = vmatprep.subr.bf16.mxu0 %v461
  %824 = vmatpush1.bf16.msra.mxu0 %v460
  %825 = vmatprep.subr.bf16.mxu0 %v463
  %826 = vmatpush1.bf16.msra.mxu0 %v462
  %827 = vmatprep.subr.bf16.mxu0 %v465
  %828 = vmatpush1.bf16.msra.mxu0 %v464
  %829 = vmatprep.subr.bf16.mxu0 %v467
  %830 = vmatpush1.bf16.msra.mxu0 %v466
  %831 = vmatprep.subr.bf16.mxu0 %v469
  %832 = vmatpush1.bf16.msra.mxu0 %v468
  %833 = vmatprep.subr.bf16.mxu0 %v471
  %834 = vmatpush1.bf16.msra.mxu0 %v470
  %835 = vmatprep.subr.bf16.mxu0 %v473
  %836 = vmatpush1.bf16.msra.mxu0 %v472
  %837 = vmatprep.subr.bf16.mxu0 %v475
  %838 = vmatpush1.bf16.msra.mxu0 %v474
  %839 = vmatprep.mubr.bf16.mxu0 %v806
  %840 = vmatmul.mubr.bf16.gmra.mrb[0].mxu0 %v805
  %v841 = vpop.f32.mrb[0].mxu0
  %v842 = vadd.f32 0.0, %v841
  %v843 = vpop.f32.mrb[0].mxu0
  %v844 = vadd.f32 0.0, %v843
  %v845 = vpop.f32.mrb[0].mxu0
  %v846 = vpop.f32.mrb[0].mxu0
  %847 = vdwg.mxu0
  %v848 = vadd.f32 %v304, %v842
  %v849 = vadd.f32 %v306, %v844
  %v850 = vtanh.pop %v848
  %v851 = vtanh.pop %v849
  %s852 = scalar_lea.vmem [#allocation2], 96
  %853 = vst [vmem:[%s852] sm:$0xff] %v850
  %854 = vst [vmem:[%s852 + $0x8] sm:$0xff] %v851
  %v855 = vpack.c.bf16 %v850, %v850
  %v856 = vpack.c.bf16 %v851, %v851
  %857 = vmatprep.subr.bf16.mxu0 %v445
  %858 = vmatpush1.bf16.msra.mxu0 %v444
  %859 = vmatprep.subr.bf16.mxu0 %v447
  %860 = vmatpush1.bf16.msra.mxu0 %v446
  %861 = vmatprep.subr.bf16.mxu0 %v449
  %862 = vmatpush1.bf16.msra.mxu0 %v448
  %863 = vmatprep.subr.bf16.mxu0 %v451
  %864 = vmatpush1.bf16.msra.mxu0 %v450
  %865 = vmatprep.subr.bf16.mxu0 %v453
  %866 = vmatpush1.bf16.msra.mxu0 %v452
  %867 = vmatprep.subr.bf16.mxu0 %v455
  %868 = vmatpush1.bf16.msra.mxu0 %v454
  %869 = vmatprep.subr.bf16.mxu0 %v457
  %870 = vmatpush1.bf16.msra.mxu0 %v456
  %871 = vmatprep.subr.bf16.mxu0 %v459
  %872 = vmatpush1.bf16.msra.mxu0 %v458
  %873 = vmatprep.subr.bf16.mxu0 %v461
  %874 = vmatpush1.bf16.msra.mxu0 %v460
  %875 = vmatprep.subr.bf16.mxu0 %v463
  %876 = vmatpush1.bf16.msra.mxu0 %v462
  %877 = vmatprep.subr.bf16.mxu0 %v465
  %878 = vmatpush1.bf16.msra.mxu0 %v464
  %879 = vmatprep.subr.bf16.mxu0 %v467
  %880 = vmatpush1.bf16.msra.mxu0 %v466
  %881 = vmatprep.subr.bf16.mxu0 %v469
  %882 = vmatpush1.bf16.msra.mxu0 %v468
  %883 = vmatprep.subr.bf16.mxu0 %v471
  %884 = vmatpush1.bf16.msra.mxu0 %v470
  %885 = vmatprep.subr.bf16.mxu0 %v473
  %886 = vmatpush1.bf16.msra.mxu0 %v472
  %887 = vmatprep.subr.bf16.mxu0 %v475
  %888 = vmatpush1.bf16.msra.mxu0 %v474
  %889 = vmatprep.mubr.bf16.mxu0 %v856
  %890 = vmatmul.mubr.bf16.gmra.mrb[0].mxu0 %v855
  %v891 = vpop.f32.mrb[0].mxu0
  %v892 = vadd.f32 0.0, %v891
  %v893 = vpop.f32.mrb[0].mxu0
  %v894 = vadd.f32 0.0, %v893
  %v895 = vpop.f32.mrb[0].mxu0
  %v896 = vpop.f32.mrb[0].mxu0
  %897 = vdwg.mxu0
  %v898 = vadd.f32 %v308, %v892
  %v899 = vadd.f32 %v310, %v894
  %v900 = vtanh.pop %v898
  %v901 = vtanh.pop %v899
  %s902 = scalar_lea.vmem [#allocation2], 112
  %903 = vst [vmem:[%s902] sm:$0xff] %v900
  %904 = vst [vmem:[%s902 + $0x8] sm:$0xff] %v901
  %905 = vst [vmem:[%s8] sm:$0xff] %v900
  %906 = vst [vmem:[%s8 + $0x8] sm:$0xff] %v901
  %s907 = smul.u32 4, 32
  %s908 = smul.u32 %s907, 1
  %s909 = sshll.u32 %s908, 4
  %910 = dma.done [#allocation4], %s909
  %v911 = vld [vmem:[#allocation2] sm:$0xff]
  %v912 = vld [vmem:[#allocation2 + $0x8] sm:$0xff]
  %v913 = vld [vmem:[#allocation2 + $0x10] sm:$0xff]
  %v914 = vld [vmem:[#allocation2 + $0x18] sm:$0xff]
  %v915 = vld [vmem:[#allocation2 + $0x20] sm:$0xff]
  %v916 = vld [vmem:[#allocation2 + $0x28] sm:$0xff]
  %v917 = vld [vmem:[#allocation2 + $0x30] sm:$0xff]
  %v918 = vld [vmem:[#allocation2 + $0x38] sm:$0xff]
  %v919 = vld [vmem:[#allocation2 + $0x40] sm:$0xff]
  %v920 = vld [vmem:[#allocation2 + $0x48] sm:$0xff]
  %v921 = vld [vmem:[#allocation2 + $0x50] sm:$0xff]
  %v922 = vld [vmem:[#allocation2 + $0x58] sm:$0xff]
  %v923 = vld [vmem:[#allocation2 + $0x60] sm:$0xff]
  %v924 = vld [vmem:[#allocation2 + $0x68] sm:$0xff]
  %v925 = vld [vmem:[#allocation2 + $0x70] sm:$0xff]
  %v926 = vld [vmem:[#allocation2 + $0x78] sm:$0xff]
  %v927 = vpack.c.bf16 %v911, %v911
  %v928 = vpack.c.bf16 %v912, %v912
  %v929 = vpack.c.bf16 %v913, %v913
  %v930 = vpack.c.bf16 %v914, %v914
  %v931 = vpack.c.bf16 %v915, %v915
  %v932 = vpack.c.bf16 %v916, %v916
  %v933 = vpack.c.bf16 %v917, %v917
  %v934 = vpack.c.bf16 %v918, %v918
  %v935 = vpack.c.bf16 %v919, %v919
  %v936 = vpack.c.bf16 %v920, %v920
  %v937 = vpack.c.bf16 %v921, %v921
  %v938 = vpack.c.bf16 %v922, %v922
  %v939 = vpack.c.bf16 %v923, %v923
  %v940 = vpack.c.bf16 %v924, %v924
  %v941 = vpack.c.bf16 %v925, %v925
  %v942 = vpack.c.bf16 %v926, %v926
  %v959 = vunpack.c.l.b16 %v927
  %v960 = vunpack.c.l.b16 %v928
  %v961 = vunpack.c.l.b16 %v929
  %v962 = vunpack.c.l.b16 %v930
  %v963 = vunpack.c.l.b16 %v931
  %v964 = vunpack.c.l.b16 %v932
  %v965 = vunpack.c.l.b16 %v933
  %v966 = vunpack.c.l.b16 %v934
  %v967 = vunpack.c.l.b16 %v935
  %v968 = vunpack.c.l.b16 %v936
  %v969 = vunpack.c.l.b16 %v937
  %v970 = vunpack.c.l.b16 %v938
  %v971 = vunpack.c.l.b16 %v939
  %v972 = vunpack.c.l.b16 %v940
  %v973 = vunpack.c.l.b16 %v941
  %v974 = vunpack.c.l.b16 %v942
  %v975 = vld [vmem:[#allocation3] sm:$0xff]
  %v976 = vld [vmem:[#allocation3 + $0x8] sm:$0xff]
  %v977 = vld [vmem:[#allocation3 + $0x10] sm:$0xff]
  %v978 = vld [vmem:[#allocation3 + $0x18] sm:$0xff]
  %v979 = vld [vmem:[#allocation3 + $0x20] sm:$0xff]
  %v980 = vld [vmem:[#allocation3 + $0x28] sm:$0xff]
  %v981 = vld [vmem:[#allocation3 + $0x30] sm:$0xff]
  %v982 = vld [vmem:[#allocation3 + $0x38] sm:$0xff]
  %v983 = vld [vmem:[#allocation3 + $0x40] sm:$0xff]
  %v984 = vld [vmem:[#allocation3 + $0x48] sm:$0xff]
  %v985 = vld [vmem:[#allocation3 + $0x50] sm:$0xff]
  %v986 = vld [vmem:[#allocation3 + $0x58] sm:$0xff]
  %v987 = vld [vmem:[#allocation3 + $0x60] sm:$0xff]
  %v988 = vld [vmem:[#allocation3 + $0x68] sm:$0xff]
  %v989 = vld [vmem:[#allocation3 + $0x70] sm:$0xff]
  %v990 = vld [vmem:[#allocation3 + $0x78] sm:$0xff]
  %v991 = vld [vmem:[%s5] sm:$0x1]
  %v993 = vlaneseq
  %v994 = vshrl.u32 %v993, 7
  %v995 = vsub.s32 0, %v994
  %v996 = vrot.slane %v991, %v995
  %v998 = vpack.c.b16 %v961, %v959
  %v999 = vpack.c.b16 %v962, %v960
  %v1000 = vpack.c.b16 %v965, %v963
  %v1001 = vpack.c.b16 %v966, %v964
  %v1002 = vpack.c.b16 %v969, %v967
  %v1003 = vpack.c.b16 %v970, %v968
  %v1004 = vpack.c.b16 %v973, %v971
  %v1005 = vpack.c.b16 %v974, %v972
  %1014 = vmatprep.subr.bf16.mxu0 0
  %1015 = vmatpush1.bf16.msra.mxu0 %v975
  %1016 = vmatprep.subr.bf16.mxu0 0
  %1017 = vmatpush1.bf16.msra.mxu0 %v976
  %1018 = vmatprep.subr.bf16.mxu0 0
  %1019 = vmatpush1.bf16.msra.mxu0 %v977
  %1020 = vmatprep.subr.bf16.mxu0 0
  %1021 = vmatpush1.bf16.msra.mxu0 %v978
  %1022 = vmatprep.subr.bf16.mxu0 0
  %1023 = vmatpush1.bf16.msra.mxu0 %v979
  %1024 = vmatprep.subr.bf16.mxu0 0
  %1025 = vmatpush1.bf16.msra.mxu0 %v980
  %1026 = vmatprep.subr.bf16.mxu0 0
  %1027 = vmatpush1.bf16.msra.mxu0 %v981
  %1028 = vmatprep.subr.bf16.mxu0 0
  %1029 = vmatpush1.bf16.msra.mxu0 %v982
  %1030 = vmatprep.subr.bf16.mxu0 0
  %1031 = vmatpush1.bf16.msra.mxu0 %v983
  %1032 = vmatprep.subr.bf16.mxu0 0
  %1033 = vmatpush1.bf16.msra.mxu0 %v984
  %1034 = vmatprep.subr.bf16.mxu0 0
  %1035 = vmatpush1.bf16.msra.mxu0 %v985
  %1036 = vmatprep.subr.bf16.mxu0 0
  %1037 = vmatpush1.bf16.msra.mxu0 %v986
  %1038 = vmatprep.subr.bf16.mxu0 0
  %1039 = vmatpush1.bf16.msra.mxu0 %v987
  %1040 = vmatprep.subr.bf16.mxu0 0
  %1041 = vmatpush1.bf16.msra.mxu0 %v988
  %1042 = vmatprep.subr.bf16.mxu0 0
  %1043 = vmatpush1.bf16.msra.mxu0 %v989
  %1044 = vmatprep.subr.bf16.mxu0 0
  %1045 = vmatpush1.bf16.msra.mxu0 %v990
  %1046 = vmatprep.mubr.bf16.mxu0 %v999
  %1047 = vmatmul.mubr.bf16.gmra.mrb[0].mxu0 %v998
  %v1048 = vpop.f32.mrb[0].mxu0
  %v1049 = vadd.f32 %v996, %v1048
  %v1050 = vpop.f32.mrb[0].mxu0
  %v1051 = vpop.f32.mrb[0].mxu0
  %v1052 = vadd.f32 %v996, %v1051
  %v1053 = vpop.f32.mrb[0].mxu0
  %1054 = vmatprep.mubr.bf16.mxu0 %v1001
  %1055 = vmatmul.mubr.bf16.gmra.mrb[0].mxu0 %v1000
  %v1056 = vpop.f32.mrb[0].mxu0
  %v1057 = vadd.f32 %v996, %v1056
  %v1058 = vpop.f32.mrb[0].mxu0
  %v1059 = vpop.f32.mrb[0].mxu0
  %v1060 = vadd.f32 %v996, %v1059
  %v1061 = vpop.f32.mrb[0].mxu0
  %1062 = vmatprep.mubr.bf16.mxu0 %v1003
  %1063 = vmatmul.mubr.bf16.gmra.mrb[0].mxu0 %v1002
  %v1064 = vpop.f32.mrb[0].mxu0
  %v1065 = vadd.f32 %v996, %v1064
  %v1066 = vpop.f32.mrb[0].mxu0
  %v1067 = vpop.f32.mrb[0].mxu0
  %v1068 = vadd.f32 %v996, %v1067
  %v1069 = vpop.f32.mrb[0].mxu0
  %1070 = vmatprep.mubr.bf16.mxu0 %v1005
  %1071 = vmatmul.mubr.bf16.gmra.mrb[0].mxu0 %v1004
  %v1072 = vpop.f32.mrb[0].mxu0
  %v1073 = vadd.f32 %v996, %v1072
  %v1074 = vpop.f32.mrb[0].mxu0
  %v1075 = vpop.f32.mrb[0].mxu0
  %v1076 = vadd.f32 %v996, %v1075
  %v1077 = vpop.f32.mrb[0].mxu0
  %1078 = vdwg.mxu0
  %1079 = vst [vmem:[%s7] sm:$0xff] %v1049
  %1080 = vst [vmem:[%s7 + $0x8] sm:$0xff] %v1052
  %1081 = vst [vmem:[%s7 + $0x10] sm:$0xff] %v1057
  %1082 = vst [vmem:[%s7 + $0x18] sm:$0xff] %v1060
  %1083 = vst [vmem:[%s7 + $0x20] sm:$0xff] %v1065
  %1084 = vst [vmem:[%s7 + $0x28] sm:$0xff] %v1068
  %1085 = vst [vmem:[%s7 + $0x30] sm:$0xff] %v1073
  %1086 = vst [vmem:[%s7 + $0x38] sm:$0xff] %v1076
  // Predicated region
  $region60: #{rnn_forward.1} parent=0 // pred_check
    _
  $region61: #{rnn_forward.1} parent=0 // pred_check_branch
    %1088 = sbr.rel (0) target = $region63
  $region62: #{rnn_forward.1} parent=0 // pred_region
    _
  $region63: #{rnn_forward.1} parent=0 // pred_fallthru
    _
  // Predicated region
  $region64: #{rnn_forward.1} parent=0 // pred_check
    _
  $region65: #{rnn_forward.1} parent=0 // pred_check_branch
    %1090 = sbr.rel (0) target = $region67
  $region66: #{rnn_forward.1} parent=0 // pred_region
    _
  $region67: #{rnn_forward.1} parent=0 // pred_fallthru
    _
  // Predicated region
  $region68: #{rnn_forward.1} parent=0 // pred_check
    _
  $region69: #{rnn_forward.1} parent=0 // pred_check_branch
    %1092 = sbr.rel (0) target = $region71
  $region70: #{rnn_forward.1} parent=0 // pred_region
    _
  $region71: #{rnn_forward.1} parent=0 // pred_fallthru
    _
  // Predicated region
  $region72: #{rnn_forward.1} parent=0 // pred_check
    _
  $region73: #{rnn_forward.1} parent=0 // pred_check_branch
    %1094 = sbr.rel (0) target = $region75
  $region74: #{rnn_forward.1} parent=0 // pred_region
    _
  $region75: #{rnn_forward.1} parent=0 // pred_fallthru
    _
  %1095 = vsyncmov [#allocation4]
  %s1096 = vpop.sfrf %1095
  %p1097 = scmp.eq.s32.totalorder %s1096, 0
  %p1098 = pneg %p1097
  %1100 = shalt.err (%p1098)

</llo_original>
